<compile_context>
chip_gen: v7x
topology: tpu7x:2x2x1
jax: 0.10.0
libtpu: 0.0.40
codegen_flags: <defaults>
</compile_context>

<pallas_src>
import functools
import math

import jax
import jax.numpy as jnp
from jax.experimental import pallas as pl
from jax.experimental.pallas import tpu as pltpu

LANE = 128


def _round_up(a, b):
    return ((a + b - 1) // b) * b


def _mem_update_kernel(x_ref, o_ref, mem_ref, *, decay, thresh):
    t = pl.program_id(1)
    x = x_ref[0]  # (TILE_R, 128)

    @pl.when(t == 0)
    def _():
        mem_ref[...] = x

    @pl.when(t > 0)
    def _():
        m = mem_ref[...]  # mem[t-1]
        # mem[t-1] * decay * (1 - spike[t-1]) + x[t], with spike[t-1] = (mem[t-1] >= thresh)
        mem_ref[...] = jnp.where(m >= thresh, 0.0, m * decay) + x

    o_ref[0] = (mem_ref[...] >= thresh).astype(jnp.float32)


def mem_update(x, decay=0.25, thresh=1.0, max_tile_r=1024):
    """Spiking membrane update. x: (T, ...) float32 -> binary spikes, same shape."""
    # TODO(synk): ActFun's surrogate-gradient backward (custom autograd) is not
    # implemented; this is the forward pass only.
    x = x.astype(jnp.float32)
    T = x.shape[0]
    M = math.prod(x.shape[1:])

    r_needed = -(-M // LANE)                      # rows of 128 lanes per timestep
    tile_r = min(max_tile_r, _round_up(r_needed, 8))
    r_pad = _round_up(r_needed, tile_r)
    num_r = r_pad // tile_r

    flat = x.reshape(T, M)
    pad = r_pad * LANE - M
    if pad:
        # Zero padding is inert: padded membranes stay 0, spikes stay 0, and the
        # padded lanes are sliced off below.
        flat = jnp.pad(flat, ((0, 0), (0, pad)))
    xr = flat.reshape(T, r_pad, LANE)

    out = pl.pallas_call(
        functools.partial(_mem_update_kernel, decay=float(decay), thresh=float(thresh)),
        out_shape=jax.ShapeDtypeStruct((T, r_pad, LANE), jnp.float32),
        grid_spec=pltpu.PrefetchScalarGridSpec(
            num_scalar_prefetch=0,
            grid=(num_r, T),                      # T innermost -> sequential recurrence
            in_specs=[pl.BlockSpec((1, tile_r, LANE), lambda r, t: (t, r, 0))],
            out_specs=pl.BlockSpec((1, tile_r, LANE), lambda r, t: (t, r, 0)),
            scratch_shapes=[pltpu.VMEM((tile_r, LANE), jnp.float32)],  # membrane state
        ),
        compiler_params=pltpu.CompilerParams(
            dimension_semantics=("parallel", "arbitrary"),
        ),
    )(xr)

    out = out.reshape(T, r_pad * LANE)
    if pad:
        out = out[:, :M]
    return out.reshape(x.shape)


def _mem_update_ref(x, decay=0.25, thresh=1.0):
    """Plain-JAX reference mirroring the PyTorch loop exactly."""
    T = x.shape[0]
    mem = jnp.zeros_like(x[0])
    spike = jnp.zeros_like(x[0])
    outs = []
    for i in range(T):
        if i >= 1:
            mem = mem * decay * (1.0 - spike) + x[i]
        else:
            mem = x[i]
        spike = (mem >= thresh).astype(jnp.float32)
        outs.append(spike)
    return jnp.stack(outs)


if __name__ == "__main__":
    key = jax.random.PRNGKey(0)
    k1, k2 = jax.random.split(key)

    # (T, N, C, H, W): 8 timesteps, batch=2, channels=4, 16x16 spatial
    x = jax.random.normal(k1, (8, 2, 4, 16, 16), jnp.float32) * 2.0

    fwd = jax.jit(mem_update)
    out = fwd(x)
    jax.block_until_ready(out)

    assert out.shape == x.shape and out.dtype == jnp.float32
    ref = _mem_update_ref(x)
    assert jnp.allclose(out, ref, atol=1e-6), float(jnp.max(jnp.abs(out - ref)))

    # Non-multiple-of-128 per-timestep size exercises the zero-pad path.
    x2 = jax.random.normal(k2, (4, 3, 5, 7, 7), jnp.float32) * 2.0
    out2 = jax.jit(mem_update)(x2)
    jax.block_until_ready(out2)
    ref2 = _mem_update_ref(x2)
    assert jnp.allclose(out2, ref2, atol=1e-6)

    print("KERNEL_OK")
</pallas_src>

<mosaic_0001>
module attributes {stable_mosaic.version = 11 : i64} {
  func.func @_mem_update_kernel(%arg0: i32, %arg1: i32, %arg2: memref<1x16x128xf32, #tpu.memory_space<vmem>>, %arg3: memref<1x16x128xf32, #tpu.memory_space<vmem>>, %arg4: memref<16x128xf32, #tpu.memory_space<vmem>>) attributes {dimension_semantics = [#tpu.dimension_semantics<parallel>, #tpu.dimension_semantics<arbitrary>], iteration_bounds = array<i64: 1, 8>, scalar_prefetch = 0 : i64, scratch_operands = 1 : i64, tpu.core_type = #tpu.core_type<tc>, window_params = [{transform_indices = @transform_0, window_bounds = array<i64: 1, 16, 128>}, {transform_indices = @transform_1, window_bounds = array<i64: 1, 16, 128>}]} {
    %c0 = arith.constant 0 : index
    %c0_0 = arith.constant 0 : index
    %c0_1 = arith.constant 0 : index
    %0 = vector.load %arg2[%c0, %c0_0, %c0_1] : memref<1x16x128xf32, #tpu.memory_space<vmem>>, vector<1x16x128xf32>
    %1 = vector.shape_cast %0 : vector<1x16x128xf32> to vector<16x128xf32>
    %c0_i32 = arith.constant 0 : i32
    %2 = arith.cmpi eq, %arg1, %c0_i32 : i32
    %3 = arith.extui %2 : i1 to i32
    %c0_i32_2 = arith.constant 0 : i32
    %4 = arith.cmpi ne, %3, %c0_i32_2 : i32
    scf.if %4 {
      %c0_10 = arith.constant 0 : index
      %c0_11 = arith.constant 0 : index
      %16 = vector.load %arg4[%c0_10, %c0_11] : memref<16x128xf32, #tpu.memory_space<vmem>>, vector<16x128xf32>
      tpu.vector_store %arg4[%c0_10, %c0_11], %1 {strides = array<i32>} : memref<16x128xf32, #tpu.memory_space<vmem>>, vector<16x128xf32>,
    } else {
    }
    %c0_i32_3 = arith.constant 0 : i32
    %5 = arith.cmpi sgt, %arg1, %c0_i32_3 : i32
    %6 = arith.extui %5 : i1 to i32
    %c0_i32_4 = arith.constant 0 : i32
    %7 = arith.cmpi ne, %6, %c0_i32_4 : i32
    scf.if %7 {
      %c0_10 = arith.constant 0 : index
      %c0_11 = arith.constant 0 : index
      %16 = vector.load %arg4[%c0_10, %c0_11] : memref<16x128xf32, #tpu.memory_space<vmem>>, vector<16x128xf32>
      %cst_12 = arith.constant 1.000000e+00 : f32
      %17 = vector.broadcast %cst_12 : f32 to vector<16x128xf32>
      %18 = arith.cmpf oge, %16, %17 : vector<16x128xf32>
      %cst_13 = arith.constant 2.500000e-01 : f32
      %19 = vector.broadcast %cst_13 : f32 to vector<16x128xf32>
      %20 = arith.mulf %16, %19 : vector<16x128xf32>
      %cst_14 = arith.constant 0.000000e+00 : f32
      %21 = vector.broadcast %cst_14 : f32 to vector<16x128xf32>
      %22 = arith.select %18, %21, %20 : vector<16x128xi1>, vector<16x128xf32>
      %23 = arith.addf %22, %1 : vector<16x128xf32>
      %c0_15 = arith.constant 0 : index
      %c0_16 = arith.constant 0 : index
      %24 = vector.load %arg4[%c0_15, %c0_16] : memref<16x128xf32, #tpu.memory_space<vmem>>, vector<16x128xf32>
      tpu.vector_store %arg4[%c0_15, %c0_16], %23 {strides = array<i32>} : memref<16x128xf32, #tpu.memory_space<vmem>>, vector<16x128xf32>,
    } else {
    }
    %c0_5 = arith.constant 0 : index
    %c0_6 = arith.constant 0 : index
    %8 = vector.load %arg4[%c0_5, %c0_6] : memref<16x128xf32, #tpu.memory_space<vmem>>, vector<16x128xf32>
    %cst = arith.constant 1.000000e+00 : f32
    %9 = vector.broadcast %cst : f32 to vector<16x128xf32>
    %10 = arith.cmpf oge, %8, %9 : vector<16x128xf32>
    %11 = arith.extui %10 : vector<16x128xi1> to vector<16x128xi32>
    %12 = arith.sitofp %11 : vector<16x128xi32> to vector<16x128xf32>
    %c0_7 = arith.constant 0 : index
    %c0_8 = arith.constant 0 : index
    %c0_9 = arith.constant 0 : index
    %13 = vector.load %arg3[%c0_7, %c0_8, %c0_9] : memref<1x16x128xf32, #tpu.memory_space<vmem>>, vector<1x16x128xf32>
    %14 = vector.shape_cast %13 : vector<1x16x128xf32> to vector<16x128xf32>
    %15 = vector.shape_cast %12 : vector<16x128xf32> to vector<1x16x128xf32>
    tpu.vector_store %arg3[%c0_7, %c0_8, %c0_9], %15 {strides = array<i32>} : memref<1x16x128xf32, #tpu.memory_space<vmem>>, vector<1x16x128xf32>,
    return
  }
  func.func @transform_0(%arg0: i32, %arg1: i32) -> (i32, i32, i32) {
    %c0_i32 = arith.constant 0 : i32
    %c0_i32_0 = arith.constant 0 : i32
    return %arg1, %arg0, %c0_i32 : i32, i32, i32
  }
  func.func @transform_1(%arg0: i32, %arg1: i32) -> (i32, i32, i32) {
    %c0_i32 = arith.constant 0 : i32
    %c0_i32_0 = arith.constant 0 : i32
    return %arg1, %arg0, %c0_i32 : i32, i32, i32
  }
}

</mosaic_0001>

<llo_original>
// kernel: mem_update.1
$region0: #{mem_update.1}
  #allocation0 [shape = 'u32[]', space=smem, size = 0x4, offset = 0x4, fixed_abs, tag = 'smem constant byte address 0x4 - core index']
  #allocation1 [shape = 'u32[144,128]{1,0:T(1,128)}', space=vmem, size = 0x12000, scoped, tag = 'internal scratch']
  #allocation2 [shape = 'f32[16,128]{1,0:T(8,128)}', space=vmem, size = 0x2000, scoped, tag = 'scratch operand']
  %s0 = inlined_call_operand.vmem [shape: f32[8,16,128], index: 0, kind: input, shape index: {}]
  %s1 = inlined_call_operand.vmem [shape: f32[8,16,128], index: 1, kind: output, shape index: {}]
  %s2 = sld [smem:[#allocation0]]
  $region45: #{mem_update.1} parent=0
    _
  %s4 = ssub.s32 1, %s2
  %s5 = scalar_select 0, %s4, %s2
  loop: start=0, step=1, limit=10
  $region2: #{mem_update.1} parent=0 // loop_pre_header
    _
  $region3: #{mem_update.1} parent=0 // loop_header
    %s7 = sphi 0, %s11
    %p8 = scmp.ge.s32.totalorder %s7, 10
    %s14 = sphi 0, %s26
    %s15 = sphi 0, %s22
    %s16 = sphi 0, %s14
    %s17 = sphi 0, %s15
    %s18 = sphi 0, %s16
    %s19 = sphi 0, %s17
    %s31 = sphi 0, %s33
    %s34 = sphi 0, %s31
    %s35 = sphi 0, %s34
    %s51 = sphi 0, %s35
    %s59 = sphi 0, %s61
    %s62 = sphi 0, %s59
    %s63 = sphi 0, %s62
    %s79 = sphi 0, %s63
  $region4: #{mem_update.1} parent=0 // loop_header_branch
    %10 = sbr.rel (%p8) target = $region8
  $region5: #{mem_update.1} parent=0 // loop_body
    %s12 = ssub.s32 %s7, 1
    %s13 = ssub.s32 %s7, 2
    %s20 = sadd.s32 1, %s15
    %p21 = scmp.ge.s32.totalorder %s20, 8
    %s22 = scalar_select %p21, 0, %s20
    %s23 = sadd.s32 1, %s14
    %s24 = scalar_select %p21, %s23, %s14
    %p25 = scmp.ge.s32.totalorder %s24, 1
    %s26 = scalar_select %p25, 0, %s24
    %s27 = ssub.s32 %s15, %s22
    %s28 = ssub.s32 %s14, %s26
    %s29 = sor.u32 %s27, %s28
    %p30 = scmp.eq.s32.totalorder %s29, 0
    %s32 = sadd.s32 %s31, 1
    %s33 = scalar_select %p30, %s31, %s32
    %p36 = pneg %p30
    %p37 = scmp.eq.s32.totalorder %s7, 7
    %p38 = por %p36, %p37
    %p39 = scmp.ne.s32.totalorder %s31, %s34
    %p40 = scmp.eq.s32.totalorder %s7, 0
    %p41 = por %p39, %p40
    %p42 = scmp.ne.s32.totalorder %s31, %s34
    %p43 = scmp.eq.s32.totalorder %s12, 7
    %p44 = por %p42, %p43
    %p45 = scmp.ne.s32.totalorder %s34, %s35
    %p46 = scmp.eq.s32.totalorder %s12, 0
    %p47 = por %p45, %p46
    %p48 = scmp.ne.s32.totalorder %s34, %s35
    %p49 = scmp.eq.s32.totalorder %s13, 7
    %p50 = por %p48, %p49
    %p52 = scmp.ne.s32.totalorder %s35, %s51
    %p53 = scmp.eq.s32.totalorder %s13, 0
    %p54 = por %p52, %p53
    %s55 = ssub.s32 %s15, %s22
    %s56 = ssub.s32 %s14, %s26
    %s57 = sor.u32 %s55, %s56
    %p58 = scmp.eq.s32.totalorder %s57, 0
    %s60 = sadd.s32 %s59, 1
    %s61 = scalar_select %p58, %s59, %s60
    %p64 = pneg %p58
    %p65 = scmp.eq.s32.totalorder %s7, 7
    %p66 = por %p64, %p65
    %p67 = scmp.ne.s32.totalorder %s59, %s62
    %p68 = scmp.eq.s32.totalorder %s7, 0
    %p69 = por %p67, %p68
    %p70 = scmp.ne.s32.totalorder %s59, %s62
    %p71 = scmp.eq.s32.totalorder %s12, 7
    %p72 = por %p70, %p71
    %p73 = scmp.ne.s32.totalorder %s62, %s63
    %p74 = scmp.eq.s32.totalorder %s12, 0
    %p75 = por %p73, %p74
    %p76 = scmp.ne.s32.totalorder %s62, %s63
    %p77 = scmp.eq.s32.totalorder %s13, 7
    %p78 = por %p76, %p77
    %p80 = scmp.ne.s32.totalorder %s63, %s79
    %p81 = scmp.eq.s32.totalorder %s13, 0
    %p82 = por %p80, %p81
    %p83 = scmp.le.s32.totalorder 1, %s7
    %p84 = scmp.lt.s32.totalorder %s7, 9
    %p85 = pnand %p83, %p84
    %p86 = pneg %p85
    // Predicated region
    $region9: #{mem_update.1} parent=5 // pred_check
      _
    $region10: #{mem_update.1} parent=5 // pred_check_branch
      %88 = sbr.rel (%p85) target = $region12
    $region11: #{mem_update.1} parent=5 // pred_region
      %s89 = ssub.s32 %s7, 1
    $region12: #{mem_update.1} parent=5 // pred_fallthru
      _
    %p90 = scmp.lt.s32.totalorder %s7, 8
    // Predicated region
    $region13: #{mem_update.1} parent=5 // pred_check
      %p91 = pneg %p90
    $region14: #{mem_update.1} parent=5 // pred_check_branch
      %93 = sbr.rel (%p91) target = $region16
    $region15: #{mem_update.1} parent=5 // pred_region
      // Predicated region
      $region17: #{mem_update.1} parent=15 // pred_check
        %p94 = pneg %p41
      $region18: #{mem_update.1} parent=15 // pred_check_branch
        %96 = sbr.rel (%p94) target = $region20
      $region19: #{mem_update.1} parent=15 // pred_region
        %s97 = smul.u32 2, %s14
        %p98 = scmp.lt.s32.totalorder %s15, 7
        %s99 = scalar_select %p98, %s15, 7
        %p100 = scmp.lt.s32.totalorder %s97, 1
        %s101 = scalar_select %p100, %s97, 1
        %s102 = smul.addr %s99, 2
        %s103 = sadd.s32 %s101, %s102
        %s104 = smul.addr %s103, 8
        %s105 = scalar_lea.vmem %s0, %s104
        %s106 = smul.u32 2, %s14
      $region20: #{mem_update.1} parent=15 // pred_fallthru
        _
    $region16: #{mem_update.1} parent=5 // pred_fallthru
      _
    %p107 = scmp.le.s32.totalorder 1, %s7
    %p108 = scmp.lt.s32.totalorder %s7, 9
    %p109 = pnand %p107, %p108
    %p110 = pneg %p109
    // Predicated region
    $region21: #{mem_update.1} parent=5 // pred_check
      _
    $region22: #{mem_update.1} parent=5 // pred_check_branch
      %112 = sbr.rel (%p109) target = $region24
    $region23: #{mem_update.1} parent=5 // pred_region
      %s113 = ssub.s32 %s7, 1
      %s114 = smul.u32 2, %s16
      %p115 = scmp.lt.s32.totalorder %s17, 7
      %s116 = scalar_select %p115, %s17, 7
      %p117 = scmp.lt.s32.totalorder %s114, 1
      %s118 = scalar_select %p117, %s114, 1
      %s119 = smul.addr %s116, 2
      %s120 = sadd.s32 %s118, %s119
      %s121 = smul.addr %s120, 8
      %s122 = scalar_lea.vmem %s0, %s121
      %p123 = pneg %p47
      %p124 = pneg %p44
      %p125 = pneg %p75
      %p126 = pneg %p72
      %s127 = smul.u32 2, %s16
      %p128 = scmp.lt.s32.totalorder %s17, 7
      %s129 = scalar_select %p128, %s17, 7
      %p130 = scmp.lt.s32.totalorder %s127, 1
      %s131 = scalar_select %p130, %s127, 1
      %s132 = smul.addr %s129, 2
      %s133 = sadd.s32 %s131, %s132
      %s134 = smul.addr %s133, 8
      %s135 = scalar_lea.vmem %s1, %s134
      %s136 = smul.u32 2, %s16
      %p137 = scmp.lt.s32.totalorder %s17, 7
      %s138 = scalar_select %p137, %s17, 7
      %p139 = scmp.lt.s32.totalorder %s136, 1
      %s140 = scalar_select %p139, %s136, 1
      %s141 = smul.addr %s138, 2
      %s142 = sadd.s32 %s140, %s141
      %s143 = smul.addr %s142, 8
      %s144 = scalar_lea.vmem %s0, %s143
      %s145 = smul.u32 2, %s16
      %s146 = smul.u32 2, %s16
      %p147 = scmp.lt.s32.totalorder %s17, 7
      %s148 = scalar_select %p147, %s17, 7
      %p149 = scmp.lt.s32.totalorder %s146, 1
      %s150 = scalar_select %p149, %s146, 1
      %s151 = smul.addr %s148, 2
      %s152 = sadd.s32 %s150, %s151
      %s153 = smul.addr %s152, 8
      %s154 = scalar_lea.vmem %s1, %s153
      %s155 = smul.u32 2, %s16
      %v156 = vld [vmem:[%s144] sm:$0xff]
      %v157 = vld [vmem:[%s144 + $0x8] sm:$0xff]
      %p158 = scmp.eq.s32.totalorder %s17, 0
      // Predicated region
      $region25: #{mem_update.1} parent=23 // pred_check
        %p159 = pneg %p158
      $region26: #{mem_update.1} parent=23 // pred_check_branch
        %161 = sbr.rel (%p159) target = $region28
      $region27: #{mem_update.1} parent=23 // pred_region
        %162 = vst [vmem:[#allocation2] sm:$0xff] %v156
        %163 = vst [vmem:[#allocation2 + $0x8] sm:$0xff] %v157
      $region28: #{mem_update.1} parent=23 // pred_fallthru
        _
      %p164 = scmp.gt.s32.totalorder %s17, 0
      // Predicated region
      $region29: #{mem_update.1} parent=23 // pred_check
        %p165 = pneg %p164
      $region30: #{mem_update.1} parent=23 // pred_check_branch
        %167 = sbr.rel (%p165) target = $region32
      $region31: #{mem_update.1} parent=23 // pred_region
        %v168 = vld [vmem:[#allocation2] sm:$0xff]
        %v169 = vld [vmem:[#allocation2 + $0x8] sm:$0xff]
        %vm170 = vcmp.ge.f32.partialorder %v168, 1.0
        %vm171 = vcmp.ge.f32.partialorder %v169, 1.0
        %v172 = vmul.f32 %v168, 0.25
        %v173 = vmul.f32 %v169, 0.25
        %v174 = vsel %vm170, 0.0, %v172
        %v175 = vsel %vm171, 0.0, %v173
        %v176 = vadd.f32 %v174, %v156
        %v177 = vadd.f32 %v175, %v157
        %178 = vst [vmem:[#allocation2] sm:$0xff] %v176
        %179 = vst [vmem:[#allocation2 + $0x8] sm:$0xff] %v177
      $region32: #{mem_update.1} parent=23 // pred_fallthru
        _
      %v180 = vld [vmem:[#allocation2] sm:$0xff]
      %v181 = vld [vmem:[#allocation2 + $0x8] sm:$0xff]
      %vm182 = vcmp.ge.f32.partialorder %v180, 1.0
      %vm183 = vcmp.ge.f32.partialorder %v181, 1.0
      %v184 = vsel %vm182, 1, 0
      %v185 = vsel %vm183, 1, 0
      %v186 = vcvt.s32.f32 %v184
      %v187 = vcvt.s32.f32 %v185
      %188 = vst [vmem:[%s154] sm:$0xff] %v186
      %189 = vst [vmem:[%s154 + $0x8] sm:$0xff] %v187
      %s190 = smul.u32 2, %s16
      %p191 = scmp.lt.s32.totalorder %s17, 7
      %s192 = scalar_select %p191, %s17, 7
      %p193 = scmp.lt.s32.totalorder %s190, 1
      %s194 = scalar_select %p193, %s190, 1
      %s195 = smul.addr %s192, 2
      %s196 = sadd.s32 %s194, %s195
      %s197 = smul.addr %s196, 8
      %s198 = scalar_lea.vmem %s1, %s197
      // Predicated region
      $region33: #{mem_update.1} parent=23 // pred_check
        %p199 = pneg %p72
      $region34: #{mem_update.1} parent=23 // pred_check_branch
        %201 = sbr.rel (%p199) target = $region36
      $region35: #{mem_update.1} parent=23 // pred_region
        %s202 = smul.u32 2, %s16
      $region36: #{mem_update.1} parent=23 // pred_fallthru
        _
    $region24: #{mem_update.1} parent=5 // pred_fallthru
      _
    %p203 = scmp.le.s32.totalorder 2, %s7
    // Predicated region
    $region37: #{mem_update.1} parent=5 // pred_check
      %p204 = pneg %p203
    $region38: #{mem_update.1} parent=5 // pred_check_branch
      %206 = sbr.rel (%p204) target = $region40
    $region39: #{mem_update.1} parent=5 // pred_region
      %s207 = ssub.s32 %s7, 2
      // Predicated region
      $region41: #{mem_update.1} parent=39 // pred_check
        %p208 = pneg %p78
      $region42: #{mem_update.1} parent=39 // pred_check_branch
        %210 = sbr.rel (%p208) target = $region44
      $region43: #{mem_update.1} parent=39 // pred_region
        %s211 = smul.u32 2, %s18
        %p212 = scmp.lt.s32.totalorder %s19, 7
        %s213 = scalar_select %p212, %s19, 7
        %p214 = scmp.lt.s32.totalorder %s211, 1
        %s215 = scalar_select %p214, %s211, 1
        %s216 = smul.addr %s213, 2
        %s217 = sadd.s32 %s215, %s216
        %s218 = smul.addr %s217, 8
        %s219 = scalar_lea.vmem %s1, %s218
      $region44: #{mem_update.1} parent=39 // pred_fallthru
        _
    $region40: #{mem_update.1} parent=5 // pred_fallthru
      _
  $region6: #{mem_update.1} parent=0 // loop_footer
    %s11 = sadd.s32 1, %s7
  $region7: #{mem_update.1} parent=0 // loop_footer_branch
    %6 = sbr.rel target = $region3
  $region8: #{mem_update.1} parent=0 // loop_exit
    _

</llo_original>
